<compile_context>
chip_gen: v7x
topology: tpu7x:2x2x1
jax: 0.10.0
libtpu: 0.0.40
codegen_flags: <defaults>
</compile_context>

<pallas_src>
import jax
import jax.numpy as jnp
from jax.experimental import pallas as pl
from jax.experimental.pallas import tpu as pltpu

_LANE = 128   # lane width (last dim)
_SUB = 8      # sublane multiple (second-to-last dim)


def _round_up(n, m):
    return ((n + m - 1) // m) * m


def _pad2(a, rows, cols):
    r, c = a.shape
    if r == rows and c == cols:
        return a
    return jnp.pad(a, ((0, rows - r), (0, cols - c)))


def _vmem_budget_bytes():
    """~85% of physical VMEM (headroom for compiler scratch / semaphores)."""
    try:
        cap = int(pltpu.get_tpu_info().vmem_capacity_bytes)
    except Exception:
        cap = 64 * 1024 * 1024        # conservative fallback (v7x size)
    return int(cap * 0.85)


# ----------------------------------------------------------------------------
# Pallas kernel: fused MLP residual block (3 matmuls + ReLUs + residual)
# operates on one (TILE_B, Dp) batch tile; weights are VMEM-resident.
# ----------------------------------------------------------------------------
def mlp_resblock_kernel(x_ref, w1_ref, b1_ref, w2_ref, b2_ref, w3_ref, b3_ref,
                        out_ref, res_ref):
    # Layer 1: Linear(in, hid) + ReLU   (bf16 MXU operands, f32 accumulation)
    h = jnp.dot(x_ref[...].astype(jnp.bfloat16), w1_ref[...],
                preferred_element_type=jnp.float32)
    h = jnp.maximum(h + b1_ref[...], 0.0)

    # Layer 2: Linear(hid, hid) + ReLU
    h = jnp.dot(h.astype(jnp.bfloat16), w2_ref[...],
                preferred_element_type=jnp.float32)
    h = jnp.maximum(h + b2_ref[...], 0.0)

    # Layer 3: Linear(hid, in)  (no activation on the output layer)
    r = jnp.dot(h.astype(jnp.bfloat16), w3_ref[...],
                preferred_element_type=jnp.float32) + b3_ref[...]

    res_ref[...] = r.astype(res_ref.dtype)
    # Re-read x only here (no full-tile f32 temp held across the matmuls).
    out_ref[...] = (x_ref[...].astype(jnp.float32) + r).astype(out_ref.dtype)


def mlp_resblock(x, w1, b1, w2, b2, w3, b3, *, tile_b=None):
    """Returns (x + residual, residual), matching MLPResBlock.forward."""
    B, D = x.shape
    H = w1.shape[1]

    # Feature dims padded to lane width only when necessary.
    Dp = _round_up(D, _LANE)
    Hp = _round_up(H, _LANE)
    io_itemsize = jnp.dtype(x.dtype).itemsize

    xp = x if D == Dp else jnp.pad(x, ((0, 0), (0, Dp - D)))
    x_is_copy = xp is not x

    w1p = _pad2(w1, Dp, Hp).astype(jnp.bfloat16)
    w2p = _pad2(w2, Hp, Hp).astype(jnp.bfloat16)
    w3p = _pad2(w3, Hp, Dp).astype(jnp.bfloat16)
    b1p = _pad2(b1, 1, Hp).astype(jnp.float32)
    b2p = _pad2(b2, 1, Hp).astype(jnp.float32)
    b3p = _pad2(b3, 1, Dp).astype(jnp.float32)

    # --- VMEM accounting -----------------------------------------------------
    budget = _vmem_budget_bytes()
    w_bytes = 2 * (Dp * Hp + Hp * Hp + Hp * Dp)          # bf16 weights (x1 buf)
    b_bytes = 4 * (2 * Hp + Dp)                          # f32 biases   (x1 buf)
    fixed_bytes = w_bytes + b_bytes
    # Per-row bytes: double-buffered x/out/res streams + f32 hidden temps.
    per_row = (2 * io_itemsize * Dp            # x tile (double buffered)
               + 2 * 2 * io_itemsize * Dp      # out + res tiles (double buffered)
               + 4 * (2 * Hp + Dp))            # f32 activation temporaries

    if tile_b is None:
        tb_fit = max((budget - fixed_bytes) // max(per_row, 1), _SUB)
        tb = min(1024, (tb_fit // _SUB) * _SUB)
        # Keep >= 2 grid steps when B allows, so v7x can shard the "parallel"
        # batch axis across its two TensorCores.
        if B > _SUB:
            tb = min(tb, _round_up((B + 1) // 2, _SUB))
        tb = max(_SUB, min(tb, _round_up(B, _SUB)))
    else:
        tb = max(_SUB, min(_round_up(tile_b, _SUB), _round_up(B, _SUB)))

    grid = ((B + tb - 1) // tb,)   # partial last tile handled by Pallas masking

    batch_spec = lambda: pl.BlockSpec((tb, Dp), lambda i: (i, 0))
    # Constant index_map -> single-buffered, VMEM-resident across grid steps.
    const = lambda shape: pl.BlockSpec(shape, lambda i: (0, 0),
                                       pipeline_mode=pl.Buffered(1))

    flops = 2 * B * (Dp * Hp + Hp * Hp + Hp * Dp)
    bytes_accessed = io_itemsize * B * Dp * 3 + w_bytes + b_bytes

    out_p, res_p = pl.pallas_call(
        mlp_resblock_kernel,
        grid=grid,
        in_specs=[
            batch_spec(),        # x        (tiled over batch)
            const((Dp, Hp)),     # w1       (VMEM-resident)
            const((1, Hp)),      # b1
            const((Hp, Hp)),     # w2
            const((1, Hp)),      # b2
            const((Hp, Dp)),     # w3
            const((1, Dp)),      # b3
        ],
        out_specs=[
            batch_spec(),        # x + residual
            batch_spec(),        # residual
        ],
        out_shape=[
            jax.ShapeDtypeStruct((B, Dp), x.dtype),
            jax.ShapeDtypeStruct((B, Dp), x.dtype),
        ],
        # Reuse xp's buffer for (x + residual) only when xp is a fresh padded
        # copy (never donate the caller's own x).
        input_output_aliases=({0: 0} if x_is_copy else {}),
        cost_estimate=pl.CostEstimate(
            flops=flops, transcendentals=0, bytes_accessed=bytes_accessed),
        compiler_params=pltpu.CompilerParams(
            dimension_semantics=("parallel",),
            vmem_limit_bytes=budget),
    )(xp, w1p, b1p, w2p, b2p, w3p, b3p)

    if D != Dp:
        out_p = out_p[:, :D]
        res_p = res_p[:, :D]
    return out_p, res_p


# ----------------------------------------------------------------------------
# Deterministic parameter init (PyTorch nn.Linear style: U(-1/sqrt(fan_in), .))
# ----------------------------------------------------------------------------
def init_linear(key, fan_in, fan_out):
    kw, kb = jax.random.split(key)
    bound = 1.0 / jnp.sqrt(fan_in)
    w = jax.random.uniform(kw, (fan_in, fan_out), jnp.float32, -bound, bound)
    b = jax.random.uniform(kb, (1, fan_out), jnp.float32, -bound, bound)
    return w, b


def reference_bf16(x, w1, b1, w2, b2, w3, b3):
    """Matches the kernel's numerics (bf16 matmul operands, f32 accumulate)."""
    mm = lambda a, w: jnp.dot(a.astype(jnp.bfloat16), w.astype(jnp.bfloat16),
                              preferred_element_type=jnp.float32)
    h = jnp.maximum(mm(x, w1) + b1, 0.0)
    h = jnp.maximum(mm(h, w2) + b2, 0.0)
    r = mm(h, w3) + b3
    return x + r, r


def reference_f32(x, w1, b1, w2, b2, w3, b3):
    h = jnp.maximum(x @ w1 + b1, 0.0)
    h = jnp.maximum(h @ w2 + b2, 0.0)
    r = h @ w3 + b3
    return x + r, r


if __name__ == "__main__":
    batch, input_size, hidden_size = 8, 32, 64

    key = jax.random.PRNGKey(0)
    kx, k1, k2, k3 = jax.random.split(key, 4)

    x = jax.random.normal(kx, (batch, input_size), jnp.float32)
    w1, b1 = init_linear(k1, input_size, hidden_size)
    w2, b2 = init_linear(k2, hidden_size, hidden_size)
    w3, b3 = init_linear(k3, hidden_size, input_size)

    out, res = jax.block_until_ready(mlp_resblock(x, w1, b1, w2, b2, w3, b3))

    ref_out, ref_res = reference_bf16(x, w1, b1, w2, b2, w3, b3)
    f32_out, f32_res = reference_f32(x, w1, b1, w2, b2, w3, b3)

    assert jnp.allclose(out, ref_out, atol=1e-4, rtol=1e-4)
    assert jnp.allclose(res, ref_res, atol=1e-4, rtol=1e-4)
    assert jnp.allclose(out, f32_out, atol=5e-2, rtol=5e-2)   # bf16 sanity
    assert jnp.allclose(out, x + res, atol=1e-6)

    # Multi-step batch grid with an auto-chosen tile (B=24 -> tb=16, 2 steps,
    # partial last block) exercising the masked last-tile path.
    xb = jax.random.normal(kx, (24, input_size), jnp.float32)
    out2, res2 = jax.block_until_ready(mlp_resblock(xb, w1, b1, w2, b2, w3, b3))
    ref2_out, ref2_res = reference_bf16(xb, w1, b1, w2, b2, w3, b3)
    assert jnp.allclose(out2, ref2_out, atol=1e-4, rtol=1e-4)
    assert jnp.allclose(res2, ref2_res, atol=1e-4, rtol=1e-4)
    assert jnp.allclose(out2, xb + res2, atol=1e-6)

    # Explicit small tile + non-divisible batch (B=20, tb=8 -> 3 steps, last
    # block has only 4 valid rows).
    xc = jax.random.normal(k1, (20, input_size), jnp.float32)
    out3, res3 = jax.block_until_ready(
        mlp_resblock(xc, w1, b1, w2, b2, w3, b3, tile_b=8))
    ref3_out, ref3_res = reference_bf16(xc, w1, b1, w2, b2, w3, b3)
    assert jnp.allclose(out3, ref3_out, atol=1e-4, rtol=1e-4)
    assert jnp.allclose(res3, ref3_res, atol=1e-4, rtol=1e-4)
    assert jnp.allclose(out3, xc + res3, atol=1e-6)

    print("KERNEL_OK")
</pallas_src>

<mosaic_0001>
module attributes {stable_mosaic.version = 11 : i64} {
  func.func @mlp_resblock_kernel(%arg0: i32, %arg1: memref<8x128xf32, #tpu.memory_space<vmem>>, %arg2: memref<128x128xbf16, #tpu.memory_space<vmem>>, %arg3: memref<1x128xf32, #tpu.memory_space<vmem>>, %arg4: memref<128x128xbf16, #tpu.memory_space<vmem>>, %arg5: memref<1x128xf32, #tpu.memory_space<vmem>>, %arg6: memref<128x128xbf16, #tpu.memory_space<vmem>>, %arg7: memref<1x128xf32, #tpu.memory_space<vmem>>, %arg8: memref<8x128xf32, #tpu.memory_space<vmem>>, %arg9: memref<8x128xf32, #tpu.memory_space<vmem>>) attributes {dimension_semantics = [#tpu.dimension_semantics<parallel>], iteration_bounds = array<i64: 1>, scalar_prefetch = 0 : i64, scratch_operands = 0 : i64, tpu.core_type = #tpu.core_type<tc>, window_params = [{transform_indices = @transform_0, window_bounds = array<i64: 8, 128>}, {pipeline_mode = #tpu.pipeline_mode<synchronous>, transform_indices = @transform_1, window_bounds = array<i64: 128, 128>}, {pipeline_mode = #tpu.pipeline_mode<synchronous>, transform_indices = @transform_2, window_bounds = array<i64: 1, 128>}, {pipeline_mode = #tpu.pipeline_mode<synchronous>, transform_indices = @transform_3, window_bounds = array<i64: 128, 128>}, {pipeline_mode = #tpu.pipeline_mode<synchronous>, transform_indices = @transform_4, window_bounds = array<i64: 1, 128>}, {pipeline_mode = #tpu.pipeline_mode<synchronous>, transform_indices = @transform_5, window_bounds = array<i64: 128, 128>}, {pipeline_mode = #tpu.pipeline_mode<synchronous>, transform_indices = @transform_6, window_bounds = array<i64: 1, 128>}, {transform_indices = @transform_7, window_bounds = array<i64: 8, 128>}, {transform_indices = @transform_8, window_bounds = array<i64: 8, 128>}]} {
    %c0 = arith.constant 0 : index
    %c0_0 = arith.constant 0 : index
    %0 = vector.load %arg1[%c0, %c0_0] : memref<8x128xf32, #tpu.memory_space<vmem>>, vector<8x128xf32>
    %1 = arith.truncf %0 : vector<8x128xf32> to vector<8x128xbf16>
    %c0_1 = arith.constant 0 : index
    %c0_2 = arith.constant 0 : index
    %2 = vector.load %arg2[%c0_1, %c0_2] : memref<128x128xbf16, #tpu.memory_space<vmem>>, vector<128x128xbf16>
    %cst = arith.constant dense<0.000000e+00> : vector<8x128xf32>
    %3 = tpu.matmul %1, %2, %cst {dimension_numbers = #tpu.dot_dimension_numbers<[1], [0], [0], [1], [0, 0, 1, 1], [], []>} : vector<8x128xbf16>, vector<128x128xbf16>, vector<8x128xf32> -> vector<8x128xf32>
    %c0_3 = arith.constant 0 : index
    %c0_4 = arith.constant 0 : index
    %4 = vector.load %arg3[%c0_3, %c0_4] : memref<1x128xf32, #tpu.memory_space<vmem>>, vector<1x128xf32>
    %5 = vector.broadcast %4 : vector<1x128xf32> to vector<8x128xf32>
    %6 = arith.addf %3, %5 : vector<8x128xf32>
    %cst_5 = arith.constant 0.000000e+00 : f32
    %7 = vector.broadcast %cst_5 : f32 to vector<8x128xf32>
    %8 = arith.maximumf %6, %7 : vector<8x128xf32>
    %9 = arith.truncf %8 : vector<8x128xf32> to vector<8x128xbf16>
    %c0_6 = arith.constant 0 : index
    %c0_7 = arith.constant 0 : index
    %10 = vector.load %arg4[%c0_6, %c0_7] : memref<128x128xbf16, #tpu.memory_space<vmem>>, vector<128x128xbf16>
    %cst_8 = arith.constant dense<0.000000e+00> : vector<8x128xf32>
    %11 = tpu.matmul %9, %10, %cst_8 {dimension_numbers = #tpu.dot_dimension_numbers<[1], [0], [0], [1], [0, 0, 1, 1], [], []>} : vector<8x128xbf16>, vector<128x128xbf16>, vector<8x128xf32> -> vector<8x128xf32>
    %c0_9 = arith.constant 0 : index
    %c0_10 = arith.constant 0 : index
    %12 = vector.load %arg5[%c0_9, %c0_10] : memref<1x128xf32, #tpu.memory_space<vmem>>, vector<1x128xf32>
    %13 = vector.broadcast %12 : vector<1x128xf32> to vector<8x128xf32>
    %14 = arith.addf %11, %13 : vector<8x128xf32>
    %cst_11 = arith.constant 0.000000e+00 : f32
    %15 = vector.broadcast %cst_11 : f32 to vector<8x128xf32>
    %16 = arith.maximumf %14, %15 : vector<8x128xf32>
    %17 = arith.truncf %16 : vector<8x128xf32> to vector<8x128xbf16>
    %c0_12 = arith.constant 0 : index
    %c0_13 = arith.constant 0 : index
    %18 = vector.load %arg6[%c0_12, %c0_13] : memref<128x128xbf16, #tpu.memory_space<vmem>>, vector<128x128xbf16>
    %cst_14 = arith.constant dense<0.000000e+00> : vector<8x128xf32>
    %19 = tpu.matmul %17, %18, %cst_14 {dimension_numbers = #tpu.dot_dimension_numbers<[1], [0], [0], [1], [0, 0, 1, 1], [], []>} : vector<8x128xbf16>, vector<128x128xbf16>, vector<8x128xf32> -> vector<8x128xf32>
    %c0_15 = arith.constant 0 : index
    %c0_16 = arith.constant 0 : index
    %20 = vector.load %arg7[%c0_15, %c0_16] : memref<1x128xf32, #tpu.memory_space<vmem>>, vector<1x128xf32>
    %21 = vector.broadcast %20 : vector<1x128xf32> to vector<8x128xf32>
    %22 = arith.addf %19, %21 : vector<8x128xf32>
    %c0_17 = arith.constant 0 : index
    %c0_18 = arith.constant 0 : index
    %23 = vector.load %arg9[%c0_17, %c0_18] : memref<8x128xf32, #tpu.memory_space<vmem>>, vector<8x128xf32>
    tpu.vector_store %arg9[%c0_17, %c0_18], %22 {strides = array<i32>} : memref<8x128xf32, #tpu.memory_space<vmem>>, vector<8x128xf32>,
    %c0_19 = arith.constant 0 : index
    %c0_20 = arith.constant 0 : index
    %24 = vector.load %arg1[%c0_19, %c0_20] : memref<8x128xf32, #tpu.memory_space<vmem>>, vector<8x128xf32>
    %25 = arith.addf %24, %22 : vector<8x128xf32>
    %c0_21 = arith.constant 0 : index
    %c0_22 = arith.constant 0 : index
    %26 = vector.load %arg8[%c0_21, %c0_22] : memref<8x128xf32, #tpu.memory_space<vmem>>, vector<8x128xf32>
    tpu.vector_store %arg8[%c0_21, %c0_22], %25 {strides = array<i32>} : memref<8x128xf32, #tpu.memory_space<vmem>>, vector<8x128xf32>,
    return
  }
  func.func @transform_0(%arg0: i32) -> (i32, i32) {
    %c0_i32 = arith.constant 0 : i32
    %c0_i32_0 = arith.constant 0 : i32
    return %arg0, %c0_i32 : i32, i32
  }
  func.func @transform_1(%arg0: i32) -> (i32, i32) {
    %c0_i32 = arith.constant 0 : i32
    %c0_i32_0 = arith.constant 0 : i32
    %c0_i32_1 = arith.constant 0 : i32
    return %c0_i32, %c0_i32_0 : i32, i32
  }
  func.func @transform_2(%arg0: i32) -> (i32, i32) {
    %c0_i32 = arith.constant 0 : i32
    %c0_i32_0 = arith.constant 0 : i32
    %c0_i32_1 = arith.constant 0 : i32
    return %c0_i32, %c0_i32_0 : i32, i32
  }
  func.func @transform_3(%arg0: i32) -> (i32, i32) {
    %c0_i32 = arith.constant 0 : i32
    %c0_i32_0 = arith.constant 0 : i32
    %c0_i32_1 = arith.constant 0 : i32
    return %c0_i32, %c0_i32_0 : i32, i32
  }
  func.func @transform_4(%arg0: i32) -> (i32, i32) {
    %c0_i32 = arith.constant 0 : i32
    %c0_i32_0 = arith.constant 0 : i32
    %c0_i32_1 = arith.constant 0 : i32
    return %c0_i32, %c0_i32_0 : i32, i32
  }
  func.func @transform_5(%arg0: i32) -> (i32, i32) {
    %c0_i32 = arith.constant 0 : i32
    %c0_i32_0 = arith.constant 0 : i32
    %c0_i32_1 = arith.constant 0 : i32
    return %c0_i32, %c0_i32_0 : i32, i32
  }
  func.func @transform_6(%arg0: i32) -> (i32, i32) {
    %c0_i32 = arith.constant 0 : i32
    %c0_i32_0 = arith.constant 0 : i32
    %c0_i32_1 = arith.constant 0 : i32
    return %c0_i32, %c0_i32_0 : i32, i32
  }
  func.func @transform_7(%arg0: i32) -> (i32, i32) {
    %c0_i32 = arith.constant 0 : i32
    %c0_i32_0 = arith.constant 0 : i32
    return %arg0, %c0_i32 : i32, i32
  }
  func.func @transform_8(%arg0: i32) -> (i32, i32) {
    %c0_i32 = arith.constant 0 : i32
    %c0_i32_0 = arith.constant 0 : i32
    return %arg0, %c0_i32 : i32, i32
  }
}

</mosaic_0001>

<llo_original>
// kernel: tpu_custom_call.1
$region0: #{tpu_custom_call.1}
  #allocation0 [shape = 'u32[]', space=smem, size = 0x4, offset = 0x4, fixed_abs, tag = 'smem constant byte address 0x4 - core index']
  #allocation1 [shape = 'u32[144,128]{1,0:T(1,128)}', space=vmem, size = 0x12000, scoped, tag = 'internal scratch']
  %s0 = inlined_call_operand.hbm [shape: f32[8,128], index: 0, kind: input, shape index: {}, may-alias: {0,7}]
  %s1 = inlined_call_operand.hbm [shape: bf16[128,128], index: 1, kind: input, shape index: {}]
  %s2 = inlined_call_operand.vmem [shape: f32[1,128], index: 2, kind: input, shape index: {}]
  %s3 = inlined_call_operand.hbm [shape: bf16[128,128], index: 3, kind: input, shape index: {}]
  %s4 = inlined_call_operand.vmem [shape: f32[1,128], index: 4, kind: input, shape index: {}]
  %s5 = inlined_call_operand.hbm [shape: bf16[128,128], index: 5, kind: input, shape index: {}]
  %s6 = inlined_call_operand.vmem [shape: f32[1,128], index: 6, kind: input, shape index: {}]
  %s7 = inlined_call_operand.hbm [shape: f32[8,128], index: 7, kind: output, shape index: {0}, may-alias: {0,7}]
  %s8 = inlined_call_operand.hbm [shape: f32[8,128], index: 8, kind: output, shape index: {1}]
  %9 = xla_tuple %s7, %s8
  %s10 = sld [smem:[#allocation0]]
  $region62: #{tpu_custom_call.1} parent=0
    _
  %s12 = ssub.s32 1, %s10
  %s13 = scalar_select 0, %s12, %s10
  $region1: #{tpu_custom_call.1} parent=0
    #allocation2 [shape = 'u8[4096]{0}', space=vmem, size = 0x1000, scoped, tag = 'input window, operand 0, single buffered']
    #allocation3 [shape = 's32[1]{0}', space=sflag, size = 0x4, scoped, tag = 'scoped memory for tpu_custom_call.1']
    #allocation4 [shape = 's32[1]{0}', space=sflag, size = 0x4, scoped, tag = 'scoped memory for tpu_custom_call.1']
    #allocation5 [shape = 'u8[32768]{0}', space=vmem, size = 0x8000, scoped, tag = 'input window, operand 1, single buffered']
    #allocation6 [shape = 's32[1]{0}', space=sflag, size = 0x4, scoped, tag = 'scoped memory for tpu_custom_call.1']
    #allocation7 [shape = 'u8[32768]{0}', space=vmem, size = 0x8000, scoped, tag = 'input window, operand 3, single buffered']
    #allocation8 [shape = 'u8[32768]{0}', space=vmem, size = 0x8000, scoped, tag = 'input window, operand 5, single buffered']
    #allocation9 [shape = 's32[1]{0}', space=sflag, size = 0x4, scoped, tag = 'scoped memory for tpu_custom_call.1']
    #allocation10 [shape = 'u8[4096]{0}', space=vmem, size = 0x1000, scoped, tag = 'output window, operand 0, single buffered']
    #allocation11 [shape = 'u8[4096]{0}', space=vmem, size = 0x1000, scoped, tag = 'output window, operand 1, single buffered']
    #allocation12 [shape = 's32[1]{0}', space=sflag, size = 0x4, scoped, tag = 'scoped memory for tpu_custom_call.1']
    %14 = vsyncpa [#allocation3], 0
    %15 = vsyncpa [#allocation6], 0
    %16 = vsyncpa [#allocation9], 0
    %17 = vsyncpa [#allocation4], 0
    %18 = vsyncpa [#allocation12], 0
    // Predicated region
    $region2: #{tpu_custom_call.1} parent=1 // pred_check
      _
    $region3: #{tpu_custom_call.1} parent=1 // pred_check_branch
      %20 = sbr.rel (0) target = $region5
    $region4: #{tpu_custom_call.1} parent=1 // pred_region
      %s22 = ssub.s32 128, 128
      %23 = vsyncadd [#allocation3], %s22
      %s25 = sshll.u32 [#allocation2], 4
      %s26 = int_to_ptr.vmem [resolvable:$true] %s25
      %28 = dma.hbm_to_vmem [thread:$0]  %s0, 128, %s26, [#allocation3]
    $region5: #{tpu_custom_call.1} parent=1 // pred_fallthru
      _
    // Predicated region
    $region6: #{tpu_custom_call.1} parent=1 // pred_check
      _
    $region7: #{tpu_custom_call.1} parent=1 // pred_check_branch
      %30 = sbr.rel (0) target = $region9
    $region8: #{tpu_custom_call.1} parent=1 // pred_region
      %s32 = ssub.s32 1024, 1024
      %33 = vsyncadd [#allocation6], %s32
      %s34 = sshll.u32 [#allocation5], 4
      %s35 = int_to_ptr.vmem [resolvable:$true] %s34
      %40 = dma.hbm_to_vmem [thread:$0]  %s1, 1024, %s35, [#allocation6], 64, 64, 4
    $region9: #{tpu_custom_call.1} parent=1 // pred_fallthru
      _
    // Predicated region
    $region10: #{tpu_custom_call.1} parent=1 // pred_check
      _
    $region11: #{tpu_custom_call.1} parent=1 // pred_check_branch
      %42 = sbr.rel (0) target = $region13
    $region12: #{tpu_custom_call.1} parent=1 // pred_region
      _
    $region13: #{tpu_custom_call.1} parent=1 // pred_fallthru
      _
    // Predicated region
    $region14: #{tpu_custom_call.1} parent=1 // pred_check
      _
    $region15: #{tpu_custom_call.1} parent=1 // pred_check_branch
      %44 = sbr.rel (0) target = $region17
    $region16: #{tpu_custom_call.1} parent=1 // pred_region
      %s46 = ssub.s32 1024, 1024
      %47 = vsyncadd [#allocation6], %s46
      %s48 = sshll.u32 [#allocation7], 4
      %s49 = int_to_ptr.vmem [resolvable:$true] %s48
      %54 = dma.hbm_to_vmem [thread:$0]  %s3, 1024, %s49, [#allocation6], 64, 64, 4
    $region17: #{tpu_custom_call.1} parent=1 // pred_fallthru
      _
    // Predicated region
    $region18: #{tpu_custom_call.1} parent=1 // pred_check
      _
    $region19: #{tpu_custom_call.1} parent=1 // pred_check_branch
      %56 = sbr.rel (0) target = $region21
    $region20: #{tpu_custom_call.1} parent=1 // pred_region
      _
    $region21: #{tpu_custom_call.1} parent=1 // pred_fallthru
      _
    // Predicated region
    $region22: #{tpu_custom_call.1} parent=1 // pred_check
      _
    $region23: #{tpu_custom_call.1} parent=1 // pred_check_branch
      %58 = sbr.rel (0) target = $region25
    $region24: #{tpu_custom_call.1} parent=1 // pred_region
      %s60 = ssub.s32 1024, 1024
      %61 = vsyncadd [#allocation9], %s60
      %s62 = sshll.u32 [#allocation8], 4
      %s63 = int_to_ptr.vmem [resolvable:$true] %s62
      %68 = dma.hbm_to_vmem [thread:$0]  %s5, 1024, %s63, [#allocation9], 64, 64, 4
    $region25: #{tpu_custom_call.1} parent=1 // pred_fallthru
      _
    // Predicated region
    $region26: #{tpu_custom_call.1} parent=1 // pred_check
      _
    $region27: #{tpu_custom_call.1} parent=1 // pred_check_branch
      %70 = sbr.rel (0) target = $region29
    $region28: #{tpu_custom_call.1} parent=1 // pred_region
      _
    $region29: #{tpu_custom_call.1} parent=1 // pred_fallthru
      _
    // Predicated region
    $region30: #{tpu_custom_call.1} parent=1 // pred_check
      _
    $region31: #{tpu_custom_call.1} parent=1 // pred_check_branch
      %72 = sbr.rel (0) target = $region33
    $region32: #{tpu_custom_call.1} parent=1 // pred_region
      %73 = dma.done [#allocation3], 128
    $region33: #{tpu_custom_call.1} parent=1 // pred_fallthru
      _
    // Predicated region
    $region34: #{tpu_custom_call.1} parent=1 // pred_check
      _
    $region35: #{tpu_custom_call.1} parent=1 // pred_check_branch
      %75 = sbr.rel (0) target = $region37
    $region36: #{tpu_custom_call.1} parent=1 // pred_region
      %76 = dma.done [#allocation6], 1024
    $region37: #{tpu_custom_call.1} parent=1 // pred_fallthru
      _
    // Predicated region
    $region38: #{tpu_custom_call.1} parent=1 // pred_check
      _
    $region39: #{tpu_custom_call.1} parent=1 // pred_check_branch
      %78 = sbr.rel (0) target = $region41
    $region40: #{tpu_custom_call.1} parent=1 // pred_region
      %79 = dma.done [#allocation6], 1024
    $region41: #{tpu_custom_call.1} parent=1 // pred_fallthru
      _
    // Predicated region
    $region42: #{tpu_custom_call.1} parent=1 // pred_check
      _
    $region43: #{tpu_custom_call.1} parent=1 // pred_check_branch
      %81 = sbr.rel (0) target = $region45
    $region44: #{tpu_custom_call.1} parent=1 // pred_region
      %82 = dma.done [#allocation9], 1024
    $region45: #{tpu_custom_call.1} parent=1 // pred_fallthru
      _
    %v84 = vld [vmem:[#allocation2] sm:$0xff]
    %v85 = vpack.c.bf16 %v84, %v84
    %v86 = vld [vmem:[#allocation5] sm:$0xf]
    %v87 = vld [vmem:[#allocation5 + $0x4] sm:$0xf]
    %v88 = vld [vmem:[#allocation5 + $0x8] sm:$0xf]
    %v89 = vld [vmem:[#allocation5 + $0xc] sm:$0xf]
    %v90 = vld [vmem:[#allocation5 + $0x10] sm:$0xf]
    %v91 = vld [vmem:[#allocation5 + $0x14] sm:$0xf]
    %v92 = vld [vmem:[#allocation5 + $0x18] sm:$0xf]
    %v93 = vld [vmem:[#allocation5 + $0x1c] sm:$0xf]
    %v94 = vld [vmem:[#allocation5 + $0x20] sm:$0xf]
    %v95 = vld [vmem:[#allocation5 + $0x24] sm:$0xf]
    %v96 = vld [vmem:[#allocation5 + $0x28] sm:$0xf]
    %v97 = vld [vmem:[#allocation5 + $0x2c] sm:$0xf]
    %v98 = vld [vmem:[#allocation5 + $0x30] sm:$0xf]
    %v99 = vld [vmem:[#allocation5 + $0x34] sm:$0xf]
    %v100 = vld [vmem:[#allocation5 + $0x38] sm:$0xf]
    %v101 = vld [vmem:[#allocation5 + $0x3c] sm:$0xf]
    %v102 = vld [vmem:[%s2] sm:$0x1]
    %v104 = vlaneseq
    %v105 = vshrl.u32 %v104, 7
    %v106 = vsub.s32 0, %v105
    %v107 = vrot.slane %v102, %v106
    %v125 = vunpack.c.l.b16 %v86
    %v126 = vunpack.c.l.b16 %v87
    %v127 = vunpack.c.l.b16 %v88
    %v128 = vunpack.c.l.b16 %v89
    %v129 = vunpack.c.l.b16 %v90
    %v130 = vunpack.c.l.b16 %v91
    %v131 = vunpack.c.l.b16 %v92
    %v132 = vunpack.c.l.b16 %v93
    %v133 = vunpack.c.l.b16 %v94
    %v134 = vunpack.c.l.b16 %v95
    %v135 = vunpack.c.l.b16 %v96
    %v136 = vunpack.c.l.b16 %v97
    %v137 = vunpack.c.l.b16 %v98
    %v138 = vunpack.c.l.b16 %v99
    %v139 = vunpack.c.l.b16 %v100
    %v140 = vunpack.c.l.b16 %v101
    %v141 = vpack.c.b16 %v126, %v125
    %v142 = vpack.c.b16 %v128, %v127
    %v143 = vpack.c.b16 %v130, %v129
    %v144 = vpack.c.b16 %v132, %v131
    %v145 = vpack.c.b16 %v134, %v133
    %v146 = vpack.c.b16 %v136, %v135
    %v147 = vpack.c.b16 %v138, %v137
    %v148 = vpack.c.b16 %v140, %v139
    %157 = vmatprep.subr.bf16.mxu0 0
    %158 = vmatpush1.bf16.msra.mxu0 %v141
    %159 = vmatprep.subr.bf16.mxu0 0
    %160 = vmatpush1.bf16.msra.mxu0 %v142
    %161 = vmatprep.subr.bf16.mxu0 0
    %162 = vmatpush1.bf16.msra.mxu0 %v143
    %163 = vmatprep.subr.bf16.mxu0 0
    %164 = vmatpush1.bf16.msra.mxu0 %v144
    %165 = vmatprep.subr.bf16.mxu0 0
    %166 = vmatpush1.bf16.msra.mxu0 %v145
    %167 = vmatprep.subr.bf16.mxu0 0
    %168 = vmatpush1.bf16.msra.mxu0 %v146
    %169 = vmatprep.subr.bf16.mxu0 0
    %170 = vmatpush1.bf16.msra.mxu0 %v147
    %171 = vmatprep.subr.bf16.mxu0 0
    %172 = vmatpush1.bf16.msra.mxu0 %v148
    %173 = vmatprep.subr.bf16.mxu0 0
    %174 = vmatpush1.bf16.msra.mxu0 0
    %175 = vmatprep.subr.bf16.mxu0 0
    %176 = vmatpush1.bf16.msra.mxu0 0
    %177 = vmatprep.subr.bf16.mxu0 0
    %178 = vmatpush1.bf16.msra.mxu0 0
    %179 = vmatprep.subr.bf16.mxu0 0
    %180 = vmatpush1.bf16.msra.mxu0 0
    %181 = vmatprep.subr.bf16.mxu0 0
    %182 = vmatpush1.bf16.msra.mxu0 0
    %183 = vmatprep.subr.bf16.mxu0 0
    %184 = vmatpush1.bf16.msra.mxu0 0
    %185 = vmatprep.subr.bf16.mxu0 0
    %186 = vmatpush1.bf16.msra.mxu0 0
    %187 = vmatprep.subr.bf16.mxu0 0
    %188 = vmatpush1.bf16.msra.mxu0 0
    %189 = vmatprep.mubr.bf16.mxu0 0
    %190 = vmatmul.mubr.bf16.gmra.mrb[0].mxu0 %v85
    %v191 = vpop.f32.mrb[0].mxu0
    %v192 = vadd.f32 %v107, %v191
    %v193 = vpop.f32.mrb[0].mxu0
    %v194 = vpop.f32.mrb[0].mxu0
    %v195 = vpop.f32.mrb[0].mxu0
    %196 = vdwg.mxu0
    %v197 = vmax.f32 %v192, 0.0
    %v198 = vpack.c.bf16 %v197, %v197
    %v199 = vld [vmem:[#allocation7] sm:$0xf]
    %v200 = vld [vmem:[#allocation7 + $0x4] sm:$0xf]
    %v201 = vld [vmem:[#allocation7 + $0x8] sm:$0xf]
    %v202 = vld [vmem:[#allocation7 + $0xc] sm:$0xf]
    %v203 = vld [vmem:[#allocation7 + $0x10] sm:$0xf]
    %v204 = vld [vmem:[#allocation7 + $0x14] sm:$0xf]
    %v205 = vld [vmem:[#allocation7 + $0x18] sm:$0xf]
    %v206 = vld [vmem:[#allocation7 + $0x1c] sm:$0xf]
    %v207 = vld [vmem:[#allocation7 + $0x20] sm:$0xf]
    %v208 = vld [vmem:[#allocation7 + $0x24] sm:$0xf]
    %v209 = vld [vmem:[#allocation7 + $0x28] sm:$0xf]
    %v210 = vld [vmem:[#allocation7 + $0x2c] sm:$0xf]
    %v211 = vld [vmem:[#allocation7 + $0x30] sm:$0xf]
    %v212 = vld [vmem:[#allocation7 + $0x34] sm:$0xf]
    %v213 = vld [vmem:[#allocation7 + $0x38] sm:$0xf]
    %v214 = vld [vmem:[#allocation7 + $0x3c] sm:$0xf]
    %v215 = vld [vmem:[%s4] sm:$0x1]
    %v217 = vlaneseq
    %v218 = vshrl.u32 %v217, 7
    %v219 = vsub.s32 0, %v218
    %v220 = vrot.slane %v215, %v219
    %v238 = vunpack.c.l.b16 %v199
    %v239 = vunpack.c.l.b16 %v200
    %v240 = vunpack.c.l.b16 %v201
    %v241 = vunpack.c.l.b16 %v202
    %v242 = vunpack.c.l.b16 %v203
    %v243 = vunpack.c.l.b16 %v204
    %v244 = vunpack.c.l.b16 %v205
    %v245 = vunpack.c.l.b16 %v206
    %v246 = vunpack.c.l.b16 %v207
    %v247 = vunpack.c.l.b16 %v208
    %v248 = vunpack.c.l.b16 %v209
    %v249 = vunpack.c.l.b16 %v210
    %v250 = vunpack.c.l.b16 %v211
    %v251 = vunpack.c.l.b16 %v212
    %v252 = vunpack.c.l.b16 %v213
    %v253 = vunpack.c.l.b16 %v214
    %v254 = vpack.c.b16 %v239, %v238
    %v255 = vpack.c.b16 %v241, %v240
    %v256 = vpack.c.b16 %v243, %v242
    %v257 = vpack.c.b16 %v245, %v244
    %v258 = vpack.c.b16 %v247, %v246
    %v259 = vpack.c.b16 %v249, %v248
    %v260 = vpack.c.b16 %v251, %v250
    %v261 = vpack.c.b16 %v253, %v252
    %270 = vmatprep.subr.bf16.mxu0 0
    %271 = vmatpush1.bf16.msra.mxu0 %v254
    %272 = vmatprep.subr.bf16.mxu0 0
    %273 = vmatpush1.bf16.msra.mxu0 %v255
    %274 = vmatprep.subr.bf16.mxu0 0
    %275 = vmatpush1.bf16.msra.mxu0 %v256
    %276 = vmatprep.subr.bf16.mxu0 0
    %277 = vmatpush1.bf16.msra.mxu0 %v257
    %278 = vmatprep.subr.bf16.mxu0 0
    %279 = vmatpush1.bf16.msra.mxu0 %v258
    %280 = vmatprep.subr.bf16.mxu0 0
    %281 = vmatpush1.bf16.msra.mxu0 %v259
    %282 = vmatprep.subr.bf16.mxu0 0
    %283 = vmatpush1.bf16.msra.mxu0 %v260
    %284 = vmatprep.subr.bf16.mxu0 0
    %285 = vmatpush1.bf16.msra.mxu0 %v261
    %286 = vmatprep.subr.bf16.mxu0 0
    %287 = vmatpush1.bf16.msra.mxu0 0
    %288 = vmatprep.subr.bf16.mxu0 0
    %289 = vmatpush1.bf16.msra.mxu0 0
    %290 = vmatprep.subr.bf16.mxu0 0
    %291 = vmatpush1.bf16.msra.mxu0 0
    %292 = vmatprep.subr.bf16.mxu0 0
    %293 = vmatpush1.bf16.msra.mxu0 0
    %294 = vmatprep.subr.bf16.mxu0 0
    %295 = vmatpush1.bf16.msra.mxu0 0
    %296 = vmatprep.subr.bf16.mxu0 0
    %297 = vmatpush1.bf16.msra.mxu0 0
    %298 = vmatprep.subr.bf16.mxu0 0
    %299 = vmatpush1.bf16.msra.mxu0 0
    %300 = vmatprep.subr.bf16.mxu0 0
    %301 = vmatpush1.bf16.msra.mxu0 0
    %302 = vmatprep.mubr.bf16.mxu0 0
    %303 = vmatmul.mubr.bf16.gmra.mrb[0].mxu0 %v198
    %v304 = vpop.f32.mrb[0].mxu0
    %v305 = vadd.f32 %v220, %v304
    %v306 = vpop.f32.mrb[0].mxu0
    %v307 = vpop.f32.mrb[0].mxu0
    %v308 = vpop.f32.mrb[0].mxu0
    %309 = vdwg.mxu0
    %v310 = vmax.f32 %v305, 0.0
    %v311 = vpack.c.bf16 %v310, %v310
    %v312 = vld [vmem:[#allocation8] sm:$0xf]
    %v313 = vld [vmem:[#allocation8 + $0x4] sm:$0xf]
    %v314 = vld [vmem:[#allocation8 + $0x8] sm:$0xf]
    %v315 = vld [vmem:[#allocation8 + $0xc] sm:$0xf]
    %v316 = vld [vmem:[#allocation8 + $0x10] sm:$0xf]
    %v317 = vld [vmem:[#allocation8 + $0x14] sm:$0xf]
    %v318 = vld [vmem:[#allocation8 + $0x18] sm:$0xf]
    %v319 = vld [vmem:[#allocation8 + $0x1c] sm:$0xf]
    %v320 = vld [vmem:[#allocation8 + $0x20] sm:$0xf]
    %v321 = vld [vmem:[#allocation8 + $0x24] sm:$0xf]
    %v322 = vld [vmem:[#allocation8 + $0x28] sm:$0xf]
    %v323 = vld [vmem:[#allocation8 + $0x2c] sm:$0xf]
    %v324 = vld [vmem:[#allocation8 + $0x30] sm:$0xf]
    %v325 = vld [vmem:[#allocation8 + $0x34] sm:$0xf]
    %v326 = vld [vmem:[#allocation8 + $0x38] sm:$0xf]
    %v327 = vld [vmem:[#allocation8 + $0x3c] sm:$0xf]
    %v328 = vld [vmem:[%s6] sm:$0x1]
    %v330 = vlaneseq
    %v331 = vshrl.u32 %v330, 7
    %v332 = vsub.s32 0, %v331
    %v333 = vrot.slane %v328, %v332
    %v351 = vunpack.c.l.b16 %v312
    %v352 = vunpack.c.l.b16 %v313
    %v353 = vunpack.c.l.b16 %v314
    %v354 = vunpack.c.l.b16 %v315
    %v355 = vunpack.c.l.b16 %v316
    %v356 = vunpack.c.l.b16 %v317
    %v357 = vunpack.c.l.b16 %v318
    %v358 = vunpack.c.l.b16 %v319
    %v359 = vunpack.c.l.b16 %v320
    %v360 = vunpack.c.l.b16 %v321
    %v361 = vunpack.c.l.b16 %v322
    %v362 = vunpack.c.l.b16 %v323
    %v363 = vunpack.c.l.b16 %v324
    %v364 = vunpack.c.l.b16 %v325
    %v365 = vunpack.c.l.b16 %v326
    %v366 = vunpack.c.l.b16 %v327
    %v367 = vpack.c.b16 %v352, %v351
    %v368 = vpack.c.b16 %v354, %v353
    %v369 = vpack.c.b16 %v356, %v355
    %v370 = vpack.c.b16 %v358, %v357
    %v371 = vpack.c.b16 %v360, %v359
    %v372 = vpack.c.b16 %v362, %v361
    %v373 = vpack.c.b16 %v364, %v363
    %v374 = vpack.c.b16 %v366, %v365
    %383 = vmatprep.subr.bf16.mxu0 0
    %384 = vmatpush1.bf16.msra.mxu0 %v367
    %385 = vmatprep.subr.bf16.mxu0 0
    %386 = vmatpush1.bf16.msra.mxu0 %v368
    %387 = vmatprep.subr.bf16.mxu0 0
    %388 = vmatpush1.bf16.msra.mxu0 %v369
    %389 = vmatprep.subr.bf16.mxu0 0
    %390 = vmatpush1.bf16.msra.mxu0 %v370
    %391 = vmatprep.subr.bf16.mxu0 0
    %392 = vmatpush1.bf16.msra.mxu0 %v371
    %393 = vmatprep.subr.bf16.mxu0 0
    %394 = vmatpush1.bf16.msra.mxu0 %v372
    %395 = vmatprep.subr.bf16.mxu0 0
    %396 = vmatpush1.bf16.msra.mxu0 %v373
    %397 = vmatprep.subr.bf16.mxu0 0
    %398 = vmatpush1.bf16.msra.mxu0 %v374
    %399 = vmatprep.subr.bf16.mxu0 0
    %400 = vmatpush1.bf16.msra.mxu0 0
    %401 = vmatprep.subr.bf16.mxu0 0
    %402 = vmatpush1.bf16.msra.mxu0 0
    %403 = vmatprep.subr.bf16.mxu0 0
    %404 = vmatpush1.bf16.msra.mxu0 0
    %405 = vmatprep.subr.bf16.mxu0 0
    %406 = vmatpush1.bf16.msra.mxu0 0
    %407 = vmatprep.subr.bf16.mxu0 0
    %408 = vmatpush1.bf16.msra.mxu0 0
    %409 = vmatprep.subr.bf16.mxu0 0
    %410 = vmatpush1.bf16.msra.mxu0 0
    %411 = vmatprep.subr.bf16.mxu0 0
    %412 = vmatpush1.bf16.msra.mxu0 0
    %413 = vmatprep.subr.bf16.mxu0 0
    %414 = vmatpush1.bf16.msra.mxu0 0
    %415 = vmatprep.mubr.bf16.mxu0 0
    %416 = vmatmul.mubr.bf16.gmra.mrb[0].mxu0 %v311
    %v417 = vpop.f32.mrb[0].mxu0
    %v418 = vadd.f32 %v333, %v417
    %v419 = vpop.f32.mrb[0].mxu0
    %v420 = vpop.f32.mrb[0].mxu0
    %v421 = vpop.f32.mrb[0].mxu0
    %422 = vdwg.mxu0
    %423 = vst [vmem:[#allocation11] sm:$0xff] %v418
    %v424 = vld [vmem:[#allocation2] sm:$0xff]
    %v425 = vadd.f32 %v424, %v418
    %426 = vst [vmem:[#allocation10] sm:$0xff] %v425
    // Predicated region
    $region46: #{tpu_custom_call.1} parent=1 // pred_check
      _
    $region47: #{tpu_custom_call.1} parent=1 // pred_check_branch
      %428 = sbr.rel (0) target = $region49
    $region48: #{tpu_custom_call.1} parent=1 // pred_region
      %s430 = ssub.s32 128, 128
      %431 = vsyncadd [#allocation4], %s430
      %s433 = sshll.u32 [#allocation10], 4
      %s434 = int_to_ptr.vmem [resolvable:$true] %s433
      %436 = dma.vmem_to_hbm [thread:$0]  %s434, 128, %s7, [#allocation4]
    $region49: #{tpu_custom_call.1} parent=1 // pred_fallthru
      _
    // Predicated region
    $region50: #{tpu_custom_call.1} parent=1 // pred_check
      _
    $region51: #{tpu_custom_call.1} parent=1 // pred_check_branch
      %438 = sbr.rel (0) target = $region53
    $region52: #{tpu_custom_call.1} parent=1 // pred_region
      %s440 = ssub.s32 128, 128
      %441 = vsyncadd [#allocation12], %s440
      %s443 = sshll.u32 [#allocation11], 4
      %s444 = int_to_ptr.vmem [resolvable:$true] %s443
      %446 = dma.vmem_to_hbm [thread:$0]  %s444, 128, %s8, [#allocation12]
    $region53: #{tpu_custom_call.1} parent=1 // pred_fallthru
      _
    // Predicated region
    $region54: #{tpu_custom_call.1} parent=1 // pred_check
      _
    $region55: #{tpu_custom_call.1} parent=1 // pred_check_branch
      %448 = sbr.rel (0) target = $region57
    $region56: #{tpu_custom_call.1} parent=1 // pred_region
      %449 = dma.done [#allocation4], 128
    $region57: #{tpu_custom_call.1} parent=1 // pred_fallthru
      _
    // Predicated region
    $region58: #{tpu_custom_call.1} parent=1 // pred_check
      _
    $region59: #{tpu_custom_call.1} parent=1 // pred_check_branch
      %451 = sbr.rel (0) target = $region61
    $region60: #{tpu_custom_call.1} parent=1 // pred_region
      %452 = dma.done [#allocation12], 128
    $region61: #{tpu_custom_call.1} parent=1 // pred_fallthru
      _
    %453 = vsyncpa [#allocation3], 1
    %454 = vsyncpa [#allocation6], 1
    %455 = vsyncpa [#allocation9], 1
    %456 = vsyncpa [#allocation4], 1
    %457 = vsyncpa [#allocation12], 1

</llo_original>
